<compile_context>
chip_gen: v7x
topology: tpu7x:2x2x1
jax: 0.10.0
libtpu: 0.0.40
codegen_flags: <defaults>
</compile_context>

<pallas_src>
import jax
import jax.numpy as jnp
from jax.experimental import pallas as pl
from jax.experimental.pallas import tpu as pltpu


def _round_up(x, m):
    return (x + m - 1) // m * m


# ---------------------------------------------------------------------------
# Kernels
# ---------------------------------------------------------------------------
def _graphconv_kernel(a_ref, xk_ref, xi_ref, wcat_ref, b_ref, alpha_ref,
                      out_ref, acc_ref):
    """GraphConv + PReLU for one row tile.  grid = (row tiles, K tiles)."""
    k = pl.program_id(1)

    @pl.when(k == 0)
    def _():
        acc_ref[...] = jnp.zeros_like(acc_ref)

    # Neighbor aggregation: acc += A[i, k] @ X[k]   (bf16 x bf16 -> f32 accumulate).
    acc_ref[...] += jnp.dot(a_ref[...], xk_ref[...],
                            preferred_element_type=jnp.float32)

    @pl.when(k == pl.num_programs(1) - 1)
    def _():
        # Fused rel/root matmul: [agg | x_root] @ [[W_rel]; [W_root]] + b
        fused = jnp.concatenate(
            [acc_ref[...].astype(jnp.bfloat16), xi_ref[...]], axis=1)
        h = jnp.dot(fused, wcat_ref[...],
                    preferred_element_type=jnp.float32) + b_ref[...]
        h = jnp.where(h > 0, h, alpha_ref[...] * h)            # PReLU
        out_ref[...] = h.astype(out_ref.dtype)


def _graphconv_final_kernel(a_ref, xk_ref, xi_ref, wcat_ref, b_ref, alpha_ref,
                            w3_ref, b3_ref, out_ref, acc_ref):
    """GraphConv + PReLU + fused post Linear (last layer)."""
    k = pl.program_id(1)

    @pl.when(k == 0)
    def _():
        acc_ref[...] = jnp.zeros_like(acc_ref)

    acc_ref[...] += jnp.dot(a_ref[...], xk_ref[...],
                            preferred_element_type=jnp.float32)

    @pl.when(k == pl.num_programs(1) - 1)
    def _():
        fused = jnp.concatenate(
            [acc_ref[...].astype(jnp.bfloat16), xi_ref[...]], axis=1)
        h = jnp.dot(fused, wcat_ref[...],
                    preferred_element_type=jnp.float32) + b_ref[...]
        h = jnp.where(h > 0, h, alpha_ref[...] * h)            # PReLU
        out_ref[...] = (jnp.dot(h.astype(jnp.bfloat16), w3_ref[...],
                                preferred_element_type=jnp.float32)
                        + b3_ref[...])


# ---------------------------------------------------------------------------
# Per-layer pallas_call wrapper
# ---------------------------------------------------------------------------
def _conv_layer(a, x, w_cat, b, alpha, *, tm, tk, out_cols, out_dtype,
                w3=None, b3=None):
    np_ = a.shape[0]
    fp = x.shape[1]
    hp = w_cat.shape[1]
    grid = (np_ // tm, np_ // tk)

    in_specs = [
        pl.BlockSpec((tm, tk), lambda i, k: (i, k)),       # A tile
        pl.BlockSpec((tk, fp), lambda i, k: (k, 0)),       # X rows for aggregation
        pl.BlockSpec((tm, fp), lambda i, k: (i, 0)),       # X rows for root term
        pl.BlockSpec((2 * fp, hp), lambda i, k: (0, 0)),   # [W_rel; W_root]
        pl.BlockSpec((1, hp), lambda i, k: (0, 0)),        # bias (broadcast row)
        pl.BlockSpec((1, hp), lambda i, k: (0, 0)),        # PReLU slope (broadcast row)
    ]
    args = [a, x, x, w_cat, b, alpha]
    kernel = _graphconv_kernel
    if w3 is not None:
        op = w3.shape[1]
        in_specs += [pl.BlockSpec((hp, op), lambda i, k: (0, 0)),   # post Linear W
                     pl.BlockSpec((1, op), lambda i, k: (0, 0))]    # post Linear b
        args += [w3, b3]
        kernel = _graphconv_final_kernel

    return pl.pallas_call(
        kernel,
        out_shape=jax.ShapeDtypeStruct((np_, out_cols), out_dtype),
        grid_spec=pltpu.PrefetchScalarGridSpec(
            num_scalar_prefetch=0,
            grid=grid,
            in_specs=in_specs,
            out_specs=pl.BlockSpec((tm, out_cols), lambda i, k: (i, 0)),
            scratch_shapes=[pltpu.VMEM((tm, fp), jnp.float32)],
        ),
        compiler_params=pltpu.CompilerParams(
            dimension_semantics=("parallel", "arbitrary"),
            vmem_limit_bytes=32 * 1024 * 1024,
        ),
    )(*args)


# ---------------------------------------------------------------------------
# Forward pass (default HigherOrderGNN config)
# ---------------------------------------------------------------------------
def higher_order_gnn_forward(x, edge_index, params):
    """x: [N, Fin] f32, edge_index: [2, E] int32, params: dict of f32 weights."""
    n, f_in = x.shape
    hidden = params["w1_rel"].shape[1]
    out_channels = params["w3"].shape[1]

    fp = _round_up(f_in, 128)
    hp = _round_up(hidden, 128)
    op = _round_up(out_channels, 128)

    # Tile sizes / padded node count.  A 512x512 bf16 tile is 0.5 MiB, so even
    # double-buffered the kernel stays far under v7x's 64 MiB VMEM.
    tile = 512
    if n <= tile:
        np_ = _round_up(max(n, 8), 128)
        tm = tk = np_
    else:
        np_ = _round_up(n, tile)
        tm = tk = tile

    # Glue: dense aggregation matrix A[dst, src] = edge multiplicity (bf16, exact <= 256).
    # Padded rows/cols are zero so padding never contaminates real nodes.
    # TODO(synk): for large sparse graphs replace the dense N^2 matrix with a CSR gather
    # kernel driven by PrefetchScalarGridSpec row offsets.
    src, dst = edge_index[0], edge_index[1]
    a = (jnp.zeros((np_, np_), jnp.float32).at[dst, src].add(1.0)
         .astype(jnp.bfloat16))

    def pad2(w, r, c):
        return jnp.zeros((r, c), w.dtype).at[:w.shape[0], :w.shape[1]].set(w)

    xp = pad2(x, np_, fp).astype(jnp.bfloat16)

    w1_cat = jnp.concatenate([pad2(params["w1_rel"], fp, hp),
                              pad2(params["w1_root"], fp, hp)],
                             axis=0).astype(jnp.bfloat16)
    b1 = pad2(params["b1_rel"], 1, hp)
    w2_cat = jnp.concatenate([pad2(params["w2_rel"], hp, hp),
                              pad2(params["w2_root"], hp, hp)],
                             axis=0).astype(jnp.bfloat16)
    b2 = pad2(params["b2_rel"], 1, hp)
    w3 = pad2(params["w3"], hp, op).astype(jnp.bfloat16)
    b3 = pad2(params["b3"], 1, op)

    alpha1 = jnp.full((1, hp), params["alpha"][0], jnp.float32)
    alpha2 = jnp.full((1, hp), params["alpha"][1], jnp.float32)

    # GraphConv 1 + PReLU (bf16 hidden activations).
    h1 = _conv_layer(a, xp, w1_cat, b1, alpha1, tm=tm, tk=tk,
                     out_cols=hp, out_dtype=jnp.bfloat16)
    # GraphConv 2 + PReLU + post Linear (fused), f32 output.
    out = _conv_layer(a, h1, w2_cat, b2, alpha2, tm=tm, tk=tk,
                      out_cols=op, out_dtype=jnp.float32, w3=w3, b3=b3)
    return out[:n, :out_channels]


# ---------------------------------------------------------------------------
# Pure-JAX f32 reference mirroring the PyTorch/PyG forward
# ---------------------------------------------------------------------------
def reference_forward(x, edge_index, params):
    n = x.shape[0]
    src, dst = edge_index[0], edge_index[1]
    a = jnp.zeros((n, n), jnp.float32).at[dst, src].add(1.0)

    def prelu(h, al):
        return jnp.where(h > 0, h, al * h)

    h = (a @ x) @ params["w1_rel"] + params["b1_rel"] + x @ params["w1_root"]
    h = prelu(h, params["alpha"][0])
    h = (a @ h) @ params["w2_rel"] + params["b2_rel"] + h @ params["w2_root"]
    h = prelu(h, params["alpha"][1])
    return h @ params["w3"] + params["b3"]


def init_params(key, f_in, hidden, out_channels):
    ks = jax.random.split(key, 7)
    scale = 0.1
    return {
        # GraphConv 1: lin_rel (with bias) + lin_root (no bias)
        "w1_rel":  scale * jax.random.normal(ks[0], (f_in, hidden), jnp.float32),
        "b1_rel":  scale * jax.random.normal(ks[1], (1, hidden), jnp.float32),
        "w1_root": scale * jax.random.normal(ks[2], (f_in, hidden), jnp.float32),
        # GraphConv 2
        "w2_rel":  scale * jax.random.normal(ks[3], (hidden, hidden), jnp.float32),
        "b2_rel":  scale * jax.random.normal(ks[4], (1, hidden), jnp.float32),
        "w2_root": scale * jax.random.normal(ks[5], (hidden, hidden), jnp.float32),
        # post Linear(-1, out)
        "w3":      scale * jax.random.normal(ks[6], (hidden, out_channels), jnp.float32),
        "b3":      jnp.zeros((1, out_channels), jnp.float32),
        # PReLU slopes (torch default init = 0.25, one per activation)
        "alpha":   jnp.array([0.25, 0.25], jnp.float32),
    }


if __name__ == "__main__":
    N, F_IN, HIDDEN, OUT = 16, 8, 32, 1

    key = jax.random.PRNGKey(0)
    k_x, k_p = jax.random.split(key)

    x = jax.random.normal(k_x, (N, F_IN), jnp.float32)

    # Deterministic small graph: bidirectional ring.
    idx = jnp.arange(N, dtype=jnp.int32)
    nxt = (idx + 1) % N
    edge_index = jnp.stack([jnp.concatenate([idx, nxt]),
                            jnp.concatenate([nxt, idx])], axis=0)  # [2, 2N]

    params = init_params(k_p, F_IN, HIDDEN, OUT)

    out = higher_order_gnn_forward(x, edge_index, params)
    out = jax.block_until_ready(out)

    ref = reference_forward(x, edge_index, params)
    assert out.shape == (N, OUT)
    # Tolerance relaxed vs. the f32 reference because A/activations/weights feed the
    # MXU in bf16 (f32 accumulation); expected deviation is ~1e-2 relative.
    assert jnp.allclose(out, ref, atol=3e-2, rtol=3e-2), (
        "mismatch vs reference, max abs diff = "
        f"{float(jnp.max(jnp.abs(out - ref)))}")

    print("KERNEL_OK")
</pallas_src>

<mosaic_0001>
module attributes {stable_mosaic.version = 11 : i64} {
  func.func @_graphconv_kernel(%arg0: i32, %arg1: i32, %arg2: memref<128x128xbf16, #tpu.memory_space<vmem>>, %arg3: memref<128x128xbf16, #tpu.memory_space<vmem>>, %arg4: memref<128x128xbf16, #tpu.memory_space<vmem>>, %arg5: memref<256x128xbf16, #tpu.memory_space<vmem>>, %arg6: memref<1x128xf32, #tpu.memory_space<vmem>>, %arg7: memref<1x128xf32, #tpu.memory_space<vmem>>, %arg8: memref<128x128xbf16, #tpu.memory_space<vmem>>, %arg9: memref<128x128xf32, #tpu.memory_space<vmem>>) attributes {dimension_semantics = [#tpu.dimension_semantics<parallel>, #tpu.dimension_semantics<arbitrary>], iteration_bounds = array<i64: 1, 1>, scalar_prefetch = 0 : i64, scratch_operands = 1 : i64, tpu.core_type = #tpu.core_type<tc>, window_params = [{transform_indices = @transform_0, window_bounds = array<i64: 128, 128>}, {transform_indices = @transform_1, window_bounds = array<i64: 128, 128>}, {transform_indices = @transform_2, window_bounds = array<i64: 128, 128>}, {pipeline_mode = #tpu.pipeline_mode<synchronous>, transform_indices = @transform_3, window_bounds = array<i64: 256, 128>}, {pipeline_mode = #tpu.pipeline_mode<synchronous>, transform_indices = @transform_4, window_bounds = array<i64: 1, 128>}, {pipeline_mode = #tpu.pipeline_mode<synchronous>, transform_indices = @transform_5, window_bounds = array<i64: 1, 128>}, {transform_indices = @transform_6, window_bounds = array<i64: 128, 128>}]} {
    %c0_i32 = arith.constant 0 : i32
    %0 = arith.cmpi eq, %arg1, %c0_i32 : i32
    %1 = arith.extui %0 : i1 to i32
    %c0_i32_0 = arith.constant 0 : i32
    %2 = arith.cmpi ne, %1, %c0_i32_0 : i32
    scf.if %2 {
      %cst_10 = arith.constant 0.000000e+00 : f32
      %12 = vector.broadcast %cst_10 : f32 to vector<128x128xf32>
      %c0_11 = arith.constant 0 : index
      %c0_12 = arith.constant 0 : index
      %13 = vector.load %arg9[%c0_11, %c0_12] : memref<128x128xf32, #tpu.memory_space<vmem>>, vector<128x128xf32>
      tpu.vector_store %arg9[%c0_11, %c0_12], %12 {strides = array<i32>} : memref<128x128xf32, #tpu.memory_space<vmem>>, vector<128x128xf32>,
    } else {
    }
    %c0 = arith.constant 0 : index
    %c0_1 = arith.constant 0 : index
    %3 = vector.load %arg9[%c0, %c0_1] : memref<128x128xf32, #tpu.memory_space<vmem>>, vector<128x128xf32>
    %c0_2 = arith.constant 0 : index
    %c0_3 = arith.constant 0 : index
    %4 = vector.load %arg2[%c0_2, %c0_3] : memref<128x128xbf16, #tpu.memory_space<vmem>>, vector<128x128xbf16>
    %c0_4 = arith.constant 0 : index
    %c0_5 = arith.constant 0 : index
    %5 = vector.load %arg3[%c0_4, %c0_5] : memref<128x128xbf16, #tpu.memory_space<vmem>>, vector<128x128xbf16>
    %cst = arith.constant dense<0.000000e+00> : vector<128x128xf32>
    %6 = tpu.matmul %4, %5, %cst {dimension_numbers = #tpu.dot_dimension_numbers<[1], [0], [0], [1], [0, 0, 1, 1], [], []>} : vector<128x128xbf16>, vector<128x128xbf16>, vector<128x128xf32> -> vector<128x128xf32>
    %7 = arith.addf %3, %6 : vector<128x128xf32>
    %c0_6 = arith.constant 0 : index
    %c0_7 = arith.constant 0 : index
    %8 = vector.load %arg9[%c0_6, %c0_7] : memref<128x128xf32, #tpu.memory_space<vmem>>, vector<128x128xf32>
    tpu.vector_store %arg9[%c0_6, %c0_7], %7 {strides = array<i32>} : memref<128x128xf32, #tpu.memory_space<vmem>>, vector<128x128xf32>,
    %c0_i32_8 = arith.constant 0 : i32
    %9 = arith.cmpi eq, %arg1, %c0_i32_8 : i32
    %10 = arith.extui %9 : i1 to i32
    %c0_i32_9 = arith.constant 0 : i32
    %11 = arith.cmpi ne, %10, %c0_i32_9 : i32
    scf.if %11 {
      %c0_10 = arith.constant 0 : index
      %c0_11 = arith.constant 0 : index
      %12 = vector.load %arg9[%c0_10, %c0_11] : memref<128x128xf32, #tpu.memory_space<vmem>>, vector<128x128xf32>
      %13 = arith.truncf %12 : vector<128x128xf32> to vector<128x128xbf16>
      %c0_12 = arith.constant 0 : index
      %c0_13 = arith.constant 0 : index
      %14 = vector.load %arg4[%c0_12, %c0_13] : memref<128x128xbf16, #tpu.memory_space<vmem>>, vector<128x128xbf16>
      %15 = tpu.concatenate %13, %14 in 1 : vector<128x128xbf16>, vector<128x128xbf16> -> vector<128x256xbf16>
      %c0_14 = arith.constant 0 : index
      %c0_15 = arith.constant 0 : index
      %16 = vector.load %arg5[%c0_14, %c0_15] : memref<256x128xbf16, #tpu.memory_space<vmem>>, vector<256x128xbf16>
      %cst_16 = arith.constant dense<0.000000e+00> : vector<128x128xf32>
      %17 = tpu.matmul %15, %16, %cst_16 {dimension_numbers = #tpu.dot_dimension_numbers<[1], [0], [0], [1], [0, 0, 1, 1], [], []>} : vector<128x256xbf16>, vector<256x128xbf16>, vector<128x128xf32> -> vector<128x128xf32>
      %c0_17 = arith.constant 0 : index
      %c0_18 = arith.constant 0 : index
      %18 = vector.load %arg6[%c0_17, %c0_18] : memref<1x128xf32, #tpu.memory_space<vmem>>, vector<1x128xf32>
      %19 = vector.broadcast %18 : vector<1x128xf32> to vector<128x128xf32>
      %20 = arith.addf %17, %19 : vector<128x128xf32>
      %cst_19 = arith.constant 0.000000e+00 : f32
      %21 = vector.broadcast %cst_19 : f32 to vector<128x128xf32>
      %22 = arith.cmpf ogt, %20, %21 : vector<128x128xf32>
      %c0_20 = arith.constant 0 : index
      %c0_21 = arith.constant 0 : index
      %23 = vector.load %arg7[%c0_20, %c0_21] : memref<1x128xf32, #tpu.memory_space<vmem>>, vector<1x128xf32>
      %24 = vector.broadcast %23 : vector<1x128xf32> to vector<128x128xf32>
      %25 = arith.mulf %24, %20 : vector<128x128xf32>
      %26 = arith.select %22, %20, %25 : vector<128x128xi1>, vector<128x128xf32>
      %27 = arith.truncf %26 : vector<128x128xf32> to vector<128x128xbf16>
      %c0_22 = arith.constant 0 : index
      %c0_23 = arith.constant 0 : index
      %28 = vector.load %arg8[%c0_22, %c0_23] : memref<128x128xbf16, #tpu.memory_space<vmem>>, vector<128x128xbf16>
      tpu.vector_store %arg8[%c0_22, %c0_23], %27 {strides = array<i32>} : memref<128x128xbf16, #tpu.memory_space<vmem>>, vector<128x128xbf16>,
    } else {
    }
    return
  }
  func.func @transform_0(%arg0: i32, %arg1: i32) -> (i32, i32) {
    %c0_i32 = arith.constant 0 : i32
    return %arg0, %arg1 : i32, i32
  }
  func.func @transform_1(%arg0: i32, %arg1: i32) -> (i32, i32) {
    %c0_i32 = arith.constant 0 : i32
    %c0_i32_0 = arith.constant 0 : i32
    return %arg1, %c0_i32 : i32, i32
  }
  func.func @transform_2(%arg0: i32, %arg1: i32) -> (i32, i32) {
    %c0_i32 = arith.constant 0 : i32
    %c0_i32_0 = arith.constant 0 : i32
    return %arg0, %c0_i32 : i32, i32
  }
  func.func @transform_3(%arg0: i32, %arg1: i32) -> (i32, i32) {
    %c0_i32 = arith.constant 0 : i32
    %c0_i32_0 = arith.constant 0 : i32
    %c0_i32_1 = arith.constant 0 : i32
    return %c0_i32, %c0_i32_0 : i32, i32
  }
  func.func @transform_4(%arg0: i32, %arg1: i32) -> (i32, i32) {
    %c0_i32 = arith.constant 0 : i32
    %c0_i32_0 = arith.constant 0 : i32
    %c0_i32_1 = arith.constant 0 : i32
    return %c0_i32, %c0_i32_0 : i32, i32
  }
  func.func @transform_5(%arg0: i32, %arg1: i32) -> (i32, i32) {
    %c0_i32 = arith.constant 0 : i32
    %c0_i32_0 = arith.constant 0 : i32
    %c0_i32_1 = arith.constant 0 : i32
    return %c0_i32, %c0_i32_0 : i32, i32
  }
  func.func @transform_6(%arg0: i32, %arg1: i32) -> (i32, i32) {
    %c0_i32 = arith.constant 0 : i32
    %c0_i32_0 = arith.constant 0 : i32
    return %arg0, %c0_i32 : i32, i32
  }
}

</mosaic_0001>

<llo_original>
// kernel: tpu_custom_call.1
$region0: #{tpu_custom_call.1}
  #allocation0 [shape = 'u32[]', space=smem, size = 0x4, offset = 0x4, fixed_abs, tag = 'smem constant byte address 0x4 - core index']
  #allocation1 [shape = 'u32[144,128]{1,0:T(1,128)}', space=vmem, size = 0x12000, scoped, tag = 'internal scratch']
  #allocation2 [shape = 'f32[128,128]{1,0:T(8,128)}', space=vmem, size = 0x10000, scoped, tag = 'scratch operand']
  %s0 = inlined_call_operand.hbm [shape: bf16[128,128], index: 0, kind: input, shape index: {}]
  %s1 = inlined_call_operand.hbm [shape: bf16[128,128], index: 1, kind: input, shape index: {}]
  %s2 = inlined_call_operand.hbm [shape: bf16[128,128], index: 2, kind: input, shape index: {}]
  %s3 = inlined_call_operand.hbm [shape: bf16[256,128], index: 3, kind: input, shape index: {}]
  %s4 = inlined_call_operand.vmem [shape: f32[1,128], index: 4, kind: input, shape index: {}]
  %s5 = inlined_call_operand.vmem [shape: f32[1,128], index: 5, kind: input, shape index: {}]
  %s6 = inlined_call_operand.hbm [shape: bf16[128,128], index: 6, kind: output, shape index: {}]
  %s7 = sld [smem:[#allocation0]]
  $region58: #{tpu_custom_call.1} parent=0
    _
  %s9 = ssub.s32 1, %s7
  %s10 = scalar_select 0, %s9, %s7
  $region1: #{tpu_custom_call.1} parent=0
    #allocation3 [shape = 'u8[32768]{0}', space=vmem, size = 0x8000, scoped, tag = 'input window, operand 0, single buffered']
    #allocation4 [shape = 's32[1]{0}', space=sflag, size = 0x4, scoped, tag = 'scoped memory for tpu_custom_call.1']
    #allocation5 [shape = 's32[1]{0}', space=sflag, size = 0x4, scoped, tag = 'scoped memory for tpu_custom_call.1']
    #allocation6 [shape = 'u8[32768]{0}', space=vmem, size = 0x8000, scoped, tag = 'input window, operand 1, single buffered']
    #allocation7 [shape = 's32[1]{0}', space=sflag, size = 0x4, scoped, tag = 'scoped memory for tpu_custom_call.1']
    #allocation8 [shape = 'u8[32768]{0}', space=vmem, size = 0x8000, scoped, tag = 'input window, operand 2, single buffered']
    #allocation9 [shape = 'u8[65536]{0}', space=vmem, size = 0x10000, scoped, tag = 'input window, operand 3, single buffered']
    #allocation10 [shape = 's32[1]{0}', space=sflag, size = 0x4, scoped, tag = 'scoped memory for tpu_custom_call.1']
    #allocation11 [shape = 'u8[32768]{0}', space=vmem, size = 0x8000, scoped, tag = 'output window, operand 0, single buffered']
    %11 = vsyncpa [#allocation4], 0
    %12 = vsyncpa [#allocation7], 0
    %13 = vsyncpa [#allocation10], 0
    %14 = vsyncpa [#allocation5], 0
    // Predicated region
    $region2: #{tpu_custom_call.1} parent=1 // pred_check
      _
    $region3: #{tpu_custom_call.1} parent=1 // pred_check_branch
      %16 = sbr.rel (0) target = $region5
    $region4: #{tpu_custom_call.1} parent=1 // pred_region
      %s18 = ssub.s32 1024, 1024
      %19 = vsyncadd [#allocation4], %s18
      %s20 = sshll.u32 [#allocation3], 4
      %s21 = int_to_ptr.vmem [resolvable:$true] %s20
      %26 = dma.hbm_to_vmem [thread:$0]  %s0, 1024, %s21, [#allocation4], 64, 64, 4
    $region5: #{tpu_custom_call.1} parent=1 // pred_fallthru
      _
    // Predicated region
    $region6: #{tpu_custom_call.1} parent=1 // pred_check
      _
    $region7: #{tpu_custom_call.1} parent=1 // pred_check_branch
      %28 = sbr.rel (0) target = $region9
    $region8: #{tpu_custom_call.1} parent=1 // pred_region
      %s30 = ssub.s32 1024, 1024
      %31 = vsyncadd [#allocation7], %s30
      %s32 = sshll.u32 [#allocation6], 4
      %s33 = int_to_ptr.vmem [resolvable:$true] %s32
      %38 = dma.hbm_to_vmem [thread:$0]  %s1, 1024, %s33, [#allocation7], 64, 64, 4
    $region9: #{tpu_custom_call.1} parent=1 // pred_fallthru
      _
    // Predicated region
    $region10: #{tpu_custom_call.1} parent=1 // pred_check
      _
    $region11: #{tpu_custom_call.1} parent=1 // pred_check_branch
      %40 = sbr.rel (0) target = $region13
    $region12: #{tpu_custom_call.1} parent=1 // pred_region
      %s42 = ssub.s32 1024, 1024
      %43 = vsyncadd [#allocation7], %s42
      %s44 = sshll.u32 [#allocation8], 4
      %s45 = int_to_ptr.vmem [resolvable:$true] %s44
      %50 = dma.hbm_to_vmem [thread:$0]  %s2, 1024, %s45, [#allocation7], 64, 64, 4
    $region13: #{tpu_custom_call.1} parent=1 // pred_fallthru
      _
    // Predicated region
    $region14: #{tpu_custom_call.1} parent=1 // pred_check
      _
    $region15: #{tpu_custom_call.1} parent=1 // pred_check_branch
      %52 = sbr.rel (0) target = $region17
    $region16: #{tpu_custom_call.1} parent=1 // pred_region
      %s54 = ssub.s32 2048, 2048
      %55 = vsyncadd [#allocation10], %s54
      %s56 = sshll.u32 [#allocation9], 4
      %s57 = int_to_ptr.vmem [resolvable:$true] %s56
      %62 = dma.hbm_to_vmem [thread:$0]  %s3, 2048, %s57, [#allocation10], 64, 64, 4
    $region17: #{tpu_custom_call.1} parent=1 // pred_fallthru
      _
    // Predicated region
    $region18: #{tpu_custom_call.1} parent=1 // pred_check
      _
    $region19: #{tpu_custom_call.1} parent=1 // pred_check_branch
      %64 = sbr.rel (0) target = $region21
    $region20: #{tpu_custom_call.1} parent=1 // pred_region
      _
    $region21: #{tpu_custom_call.1} parent=1 // pred_fallthru
      _
    // Predicated region
    $region22: #{tpu_custom_call.1} parent=1 // pred_check
      _
    $region23: #{tpu_custom_call.1} parent=1 // pred_check_branch
      %66 = sbr.rel (0) target = $region25
    $region24: #{tpu_custom_call.1} parent=1 // pred_region
      _
    $region25: #{tpu_custom_call.1} parent=1 // pred_fallthru
      _
    // Predicated region
    $region26: #{tpu_custom_call.1} parent=1 // pred_check
      _
    $region27: #{tpu_custom_call.1} parent=1 // pred_check_branch
      %68 = sbr.rel (0) target = $region29
    $region28: #{tpu_custom_call.1} parent=1 // pred_region
      %69 = dma.done [#allocation4], 1024
    $region29: #{tpu_custom_call.1} parent=1 // pred_fallthru
      _
    // Predicated region
    $region30: #{tpu_custom_call.1} parent=1 // pred_check
      _
    $region31: #{tpu_custom_call.1} parent=1 // pred_check_branch
      %71 = sbr.rel (0) target = $region33
    $region32: #{tpu_custom_call.1} parent=1 // pred_region
      %72 = dma.done [#allocation7], 1024
    $region33: #{tpu_custom_call.1} parent=1 // pred_fallthru
      _
    // Predicated region
    $region34: #{tpu_custom_call.1} parent=1 // pred_check
      _
    $region35: #{tpu_custom_call.1} parent=1 // pred_check_branch
      %74 = sbr.rel (0) target = $region37
    $region36: #{tpu_custom_call.1} parent=1 // pred_region
      %75 = dma.done [#allocation7], 1024
    $region37: #{tpu_custom_call.1} parent=1 // pred_fallthru
      _
    // Predicated region
    $region38: #{tpu_custom_call.1} parent=1 // pred_check
      _
    $region39: #{tpu_custom_call.1} parent=1 // pred_check_branch
      %77 = sbr.rel (0) target = $region41
    $region40: #{tpu_custom_call.1} parent=1 // pred_region
      %78 = dma.done [#allocation10], 2048
    $region41: #{tpu_custom_call.1} parent=1 // pred_fallthru
      _
    %p80 = scmp.eq.s32.totalorder 0, 0
    // Predicated region
    $region42: #{tpu_custom_call.1} parent=1 // pred_check
      %p81 = pneg %p80
    $region43: #{tpu_custom_call.1} parent=1 // pred_check_branch
      %83 = sbr.rel (%p81) target = $region45
    $region44: #{tpu_custom_call.1} parent=1 // pred_region
      %84 = vst [vmem:[#allocation2] sm:$0xff] 0.0
      %85 = vst [vmem:[#allocation2 + $0x8] sm:$0xff] 0.0
      %86 = vst [vmem:[#allocation2 + $0x10] sm:$0xff] 0.0
      %87 = vst [vmem:[#allocation2 + $0x18] sm:$0xff] 0.0
      %88 = vst [vmem:[#allocation2 + $0x20] sm:$0xff] 0.0
      %89 = vst [vmem:[#allocation2 + $0x28] sm:$0xff] 0.0
      %90 = vst [vmem:[#allocation2 + $0x30] sm:$0xff] 0.0
      %91 = vst [vmem:[#allocation2 + $0x38] sm:$0xff] 0.0
      %92 = vst [vmem:[#allocation2 + $0x40] sm:$0xff] 0.0
      %93 = vst [vmem:[#allocation2 + $0x48] sm:$0xff] 0.0
      %94 = vst [vmem:[#allocation2 + $0x50] sm:$0xff] 0.0
      %95 = vst [vmem:[#allocation2 + $0x58] sm:$0xff] 0.0
      %96 = vst [vmem:[#allocation2 + $0x60] sm:$0xff] 0.0
      %97 = vst [vmem:[#allocation2 + $0x68] sm:$0xff] 0.0
      %98 = vst [vmem:[#allocation2 + $0x70] sm:$0xff] 0.0
      %99 = vst [vmem:[#allocation2 + $0x78] sm:$0xff] 0.0
    $region45: #{tpu_custom_call.1} parent=1 // pred_fallthru
      _
    %v100 = vld [vmem:[#allocation2] sm:$0xff]
    %v101 = vld [vmem:[#allocation2 + $0x8] sm:$0xff]
    %v102 = vld [vmem:[#allocation2 + $0x10] sm:$0xff]
    %v103 = vld [vmem:[#allocation2 + $0x18] sm:$0xff]
    %v104 = vld [vmem:[#allocation2 + $0x20] sm:$0xff]
    %v105 = vld [vmem:[#allocation2 + $0x28] sm:$0xff]
    %v106 = vld [vmem:[#allocation2 + $0x30] sm:$0xff]
    %v107 = vld [vmem:[#allocation2 + $0x38] sm:$0xff]
    %v108 = vld [vmem:[#allocation2 + $0x40] sm:$0xff]
    %v109 = vld [vmem:[#allocation2 + $0x48] sm:$0xff]
    %v110 = vld [vmem:[#allocation2 + $0x50] sm:$0xff]
    %v111 = vld [vmem:[#allocation2 + $0x58] sm:$0xff]
    %v112 = vld [vmem:[#allocation2 + $0x60] sm:$0xff]
    %v113 = vld [vmem:[#allocation2 + $0x68] sm:$0xff]
    %v114 = vld [vmem:[#allocation2 + $0x70] sm:$0xff]
    %v115 = vld [vmem:[#allocation2 + $0x78] sm:$0xff]
    %v116 = vld [vmem:[#allocation3] sm:$0xf]
    %v117 = vld [vmem:[#allocation3 + $0x4] sm:$0xf]
    %v118 = vld [vmem:[#allocation3 + $0x8] sm:$0xf]
    %v119 = vld [vmem:[#allocation3 + $0xc] sm:$0xf]
    %v120 = vld [vmem:[#allocation3 + $0x10] sm:$0xf]
    %v121 = vld [vmem:[#allocation3 + $0x14] sm:$0xf]
    %v122 = vld [vmem:[#allocation3 + $0x18] sm:$0xf]
    %v123 = vld [vmem:[#allocation3 + $0x1c] sm:$0xf]
    %v124 = vld [vmem:[#allocation3 + $0x20] sm:$0xf]
    %v125 = vld [vmem:[#allocation3 + $0x24] sm:$0xf]
    %v126 = vld [vmem:[#allocation3 + $0x28] sm:$0xf]
    %v127 = vld [vmem:[#allocation3 + $0x2c] sm:$0xf]
    %v128 = vld [vmem:[#allocation3 + $0x30] sm:$0xf]
    %v129 = vld [vmem:[#allocation3 + $0x34] sm:$0xf]
    %v130 = vld [vmem:[#allocation3 + $0x38] sm:$0xf]
    %v131 = vld [vmem:[#allocation3 + $0x3c] sm:$0xf]
    %v132 = vld [vmem:[#allocation6] sm:$0xf]
    %v133 = vld [vmem:[#allocation6 + $0x4] sm:$0xf]
    %v134 = vld [vmem:[#allocation6 + $0x8] sm:$0xf]
    %v135 = vld [vmem:[#allocation6 + $0xc] sm:$0xf]
    %v136 = vld [vmem:[#allocation6 + $0x10] sm:$0xf]
    %v137 = vld [vmem:[#allocation6 + $0x14] sm:$0xf]
    %v138 = vld [vmem:[#allocation6 + $0x18] sm:$0xf]
    %v139 = vld [vmem:[#allocation6 + $0x1c] sm:$0xf]
    %v140 = vld [vmem:[#allocation6 + $0x20] sm:$0xf]
    %v141 = vld [vmem:[#allocation6 + $0x24] sm:$0xf]
    %v142 = vld [vmem:[#allocation6 + $0x28] sm:$0xf]
    %v143 = vld [vmem:[#allocation6 + $0x2c] sm:$0xf]
    %v144 = vld [vmem:[#allocation6 + $0x30] sm:$0xf]
    %v145 = vld [vmem:[#allocation6 + $0x34] sm:$0xf]
    %v146 = vld [vmem:[#allocation6 + $0x38] sm:$0xf]
    %v147 = vld [vmem:[#allocation6 + $0x3c] sm:$0xf]
    %v164 = vunpack.c.l.b16 %v116
    %v165 = vunpack.c.l.b16 %v117
    %v166 = vunpack.c.l.b16 %v118
    %v167 = vunpack.c.l.b16 %v119
    %v168 = vunpack.c.l.b16 %v120
    %v169 = vunpack.c.l.b16 %v121
    %v170 = vunpack.c.l.b16 %v122
    %v171 = vunpack.c.l.b16 %v123
    %v172 = vunpack.c.l.b16 %v124
    %v173 = vunpack.c.l.b16 %v125
    %v174 = vunpack.c.l.b16 %v126
    %v175 = vunpack.c.l.b16 %v127
    %v176 = vunpack.c.l.b16 %v128
    %v177 = vunpack.c.l.b16 %v129
    %v178 = vunpack.c.l.b16 %v130
    %v179 = vunpack.c.l.b16 %v131
    %v180 = vpack.c.b16 %v165, %v164
    %v181 = vpack.c.b16 %v167, %v166
    %v182 = vpack.c.b16 %v169, %v168
    %v183 = vpack.c.b16 %v171, %v170
    %v184 = vpack.c.b16 %v173, %v172
    %v185 = vpack.c.b16 %v175, %v174
    %v186 = vpack.c.b16 %v177, %v176
    %v187 = vpack.c.b16 %v179, %v178
    %v212 = vunpack.c.l.b16 %v132
    %v213 = vunpack.c.l.b16 %v133
    %v214 = vunpack.c.l.b16 %v134
    %v215 = vunpack.c.l.b16 %v135
    %v216 = vunpack.c.l.b16 %v136
    %v217 = vunpack.c.l.b16 %v137
    %v218 = vunpack.c.l.b16 %v138
    %v219 = vunpack.c.l.b16 %v139
    %v220 = vunpack.c.l.b16 %v140
    %v221 = vunpack.c.l.b16 %v141
    %v222 = vunpack.c.l.b16 %v142
    %v223 = vunpack.c.l.b16 %v143
    %v224 = vunpack.c.l.b16 %v144
    %v225 = vunpack.c.l.b16 %v145
    %v226 = vunpack.c.l.b16 %v146
    %v227 = vunpack.c.l.b16 %v147
    %v228 = vpack.c.b16 %v213, %v212
    %v229 = vpack.c.b16 %v215, %v214
    %v230 = vpack.c.b16 %v217, %v216
    %v231 = vpack.c.b16 %v219, %v218
    %v232 = vpack.c.b16 %v221, %v220
    %v233 = vpack.c.b16 %v223, %v222
    %v234 = vpack.c.b16 %v225, %v224
    %v235 = vpack.c.b16 %v227, %v226
    %244 = vmatprep.subr.bf16.mxu0 0
    %245 = vmatpush1.bf16.msra.mxu0 %v228
    %246 = vmatprep.subr.bf16.mxu0 0
    %247 = vmatpush1.bf16.msra.mxu0 %v229
    %248 = vmatprep.subr.bf16.mxu0 0
    %249 = vmatpush1.bf16.msra.mxu0 %v230
    %250 = vmatprep.subr.bf16.mxu0 0
    %251 = vmatpush1.bf16.msra.mxu0 %v231
    %252 = vmatprep.subr.bf16.mxu0 0
    %253 = vmatpush1.bf16.msra.mxu0 %v232
    %254 = vmatprep.subr.bf16.mxu0 0
    %255 = vmatpush1.bf16.msra.mxu0 %v233
    %256 = vmatprep.subr.bf16.mxu0 0
    %257 = vmatpush1.bf16.msra.mxu0 %v234
    %258 = vmatprep.subr.bf16.mxu0 0
    %259 = vmatpush1.bf16.msra.mxu0 %v235
    %260 = vmatprep.subr.bf16.mxu0 0
    %261 = vmatpush1.bf16.msra.mxu0 0
    %262 = vmatprep.subr.bf16.mxu0 0
    %263 = vmatpush1.bf16.msra.mxu0 0
    %264 = vmatprep.subr.bf16.mxu0 0
    %265 = vmatpush1.bf16.msra.mxu0 0
    %266 = vmatprep.subr.bf16.mxu0 0
    %267 = vmatpush1.bf16.msra.mxu0 0
    %268 = vmatprep.subr.bf16.mxu0 0
    %269 = vmatpush1.bf16.msra.mxu0 0
    %270 = vmatprep.subr.bf16.mxu0 0
    %271 = vmatpush1.bf16.msra.mxu0 0
    %272 = vmatprep.subr.bf16.mxu0 0
    %273 = vmatpush1.bf16.msra.mxu0 0
    %274 = vmatprep.subr.bf16.mxu0 0
    %275 = vmatpush1.bf16.msra.mxu0 0
    %276 = vmatprep.mubr.bf16.mxu0 0
    %277 = vmatmul.mubr.bf16.gmra.mrb[0].mxu0 %v180
    %v278 = vpop.f32.mrb[0].mxu0
    %v279 = vadd.f32 0.0, %v278
    %v280 = vpop.f32.mrb[0].mxu0
    %v281 = vpop.f32.mrb[0].mxu0
    %v282 = vadd.f32 0.0, %v281
    %v283 = vpop.f32.mrb[0].mxu0
    %284 = vmatprep.mubr.bf16.mxu0 0
    %285 = vmatmul.mubr.bf16.gmra.mrb[0].mxu0 %v181
    %v286 = vpop.f32.mrb[0].mxu0
    %v287 = vadd.f32 0.0, %v286
    %v288 = vpop.f32.mrb[0].mxu0
    %v289 = vpop.f32.mrb[0].mxu0
    %v290 = vadd.f32 0.0, %v289
    %v291 = vpop.f32.mrb[0].mxu0
    %292 = vmatprep.mubr.bf16.mxu0 0
    %293 = vmatmul.mubr.bf16.gmra.mrb[0].mxu0 %v182
    %v294 = vpop.f32.mrb[0].mxu0
    %v295 = vadd.f32 0.0, %v294
    %v296 = vpop.f32.mrb[0].mxu0
    %v297 = vpop.f32.mrb[0].mxu0
    %v298 = vadd.f32 0.0, %v297
    %v299 = vpop.f32.mrb[0].mxu0
    %300 = vmatprep.mubr.bf16.mxu0 0
    %301 = vmatmul.mubr.bf16.gmra.mrb[0].mxu0 %v183
    %v302 = vpop.f32.mrb[0].mxu0
    %v303 = vadd.f32 0.0, %v302
    %v304 = vpop.f32.mrb[0].mxu0
    %v305 = vpop.f32.mrb[0].mxu0
    %v306 = vadd.f32 0.0, %v305
    %v307 = vpop.f32.mrb[0].mxu0
    %308 = vmatprep.mubr.bf16.mxu0 0
    %309 = vmatmul.mubr.bf16.gmra.mrb[0].mxu0 %v184
    %v310 = vpop.f32.mrb[0].mxu0
    %v311 = vadd.f32 0.0, %v310
    %v312 = vpop.f32.mrb[0].mxu0
    %v313 = vpop.f32.mrb[0].mxu0
    %v314 = vadd.f32 0.0, %v313
    %v315 = vpop.f32.mrb[0].mxu0
    %316 = vmatprep.mubr.bf16.mxu0 0
    %317 = vmatmul.mubr.bf16.gmra.mrb[0].mxu0 %v185
    %v318 = vpop.f32.mrb[0].mxu0
    %v319 = vadd.f32 0.0, %v318
    %v320 = vpop.f32.mrb[0].mxu0
    %v321 = vpop.f32.mrb[0].mxu0
    %v322 = vadd.f32 0.0, %v321
    %v323 = vpop.f32.mrb[0].mxu0
    %324 = vmatprep.mubr.bf16.mxu0 0
    %325 = vmatmul.mubr.bf16.gmra.mrb[0].mxu0 %v186
    %v326 = vpop.f32.mrb[0].mxu0
    %v327 = vadd.f32 0.0, %v326
    %v328 = vpop.f32.mrb[0].mxu0
    %v329 = vpop.f32.mrb[0].mxu0
    %v330 = vadd.f32 0.0, %v329
    %v331 = vpop.f32.mrb[0].mxu0
    %332 = vmatprep.mubr.bf16.mxu0 0
    %333 = vmatmul.mubr.bf16.gmra.mrb[0].mxu0 %v187
    %v334 = vpop.f32.mrb[0].mxu0
    %v335 = vadd.f32 0.0, %v334
    %v336 = vpop.f32.mrb[0].mxu0
    %v337 = vpop.f32.mrb[0].mxu0
    %v338 = vadd.f32 0.0, %v337
    %v339 = vpop.f32.mrb[0].mxu0
    %340 = vdwg.mxu0
    %v341 = vadd.f32 %v100, %v279
    %v342 = vadd.f32 %v101, %v282
    %v343 = vadd.f32 %v102, %v287
    %v344 = vadd.f32 %v103, %v290
    %v345 = vadd.f32 %v104, %v295
    %v346 = vadd.f32 %v105, %v298
    %v347 = vadd.f32 %v106, %v303
    %v348 = vadd.f32 %v107, %v306
    %v349 = vadd.f32 %v108, %v311
    %v350 = vadd.f32 %v109, %v314
    %v351 = vadd.f32 %v110, %v319
    %v352 = vadd.f32 %v111, %v322
    %v353 = vadd.f32 %v112, %v327
    %v354 = vadd.f32 %v113, %v330
    %v355 = vadd.f32 %v114, %v335
    %v356 = vadd.f32 %v115, %v338
    %357 = vst [vmem:[#allocation2] sm:$0xff] %v341
    %358 = vst [vmem:[#allocation2 + $0x8] sm:$0xff] %v342
    %359 = vst [vmem:[#allocation2 + $0x10] sm:$0xff] %v343
    %360 = vst [vmem:[#allocation2 + $0x18] sm:$0xff] %v344
    %361 = vst [vmem:[#allocation2 + $0x20] sm:$0xff] %v345
    %362 = vst [vmem:[#allocation2 + $0x28] sm:$0xff] %v346
    %363 = vst [vmem:[#allocation2 + $0x30] sm:$0xff] %v347
    %364 = vst [vmem:[#allocation2 + $0x38] sm:$0xff] %v348
    %365 = vst [vmem:[#allocation2 + $0x40] sm:$0xff] %v349
    %366 = vst [vmem:[#allocation2 + $0x48] sm:$0xff] %v350
    %367 = vst [vmem:[#allocation2 + $0x50] sm:$0xff] %v351
    %368 = vst [vmem:[#allocation2 + $0x58] sm:$0xff] %v352
    %369 = vst [vmem:[#allocation2 + $0x60] sm:$0xff] %v353
    %370 = vst [vmem:[#allocation2 + $0x68] sm:$0xff] %v354
    %371 = vst [vmem:[#allocation2 + $0x70] sm:$0xff] %v355
    %372 = vst [vmem:[#allocation2 + $0x78] sm:$0xff] %v356
    // Predicated region
    $region46: #{tpu_custom_call.1} parent=1 // pred_check
      %p373 = pneg %p80
    $region47: #{tpu_custom_call.1} parent=1 // pred_check_branch
      %375 = sbr.rel (%p373) target = $region49
    $region48: #{tpu_custom_call.1} parent=1 // pred_region
      %v376 = vld [vmem:[#allocation2] sm:$0xff]
      %v377 = vld [vmem:[#allocation2 + $0x8] sm:$0xff]
      %v378 = vld [vmem:[#allocation2 + $0x10] sm:$0xff]
      %v379 = vld [vmem:[#allocation2 + $0x18] sm:$0xff]
      %v380 = vld [vmem:[#allocation2 + $0x20] sm:$0xff]
      %v381 = vld [vmem:[#allocation2 + $0x28] sm:$0xff]
      %v382 = vld [vmem:[#allocation2 + $0x30] sm:$0xff]
      %v383 = vld [vmem:[#allocation2 + $0x38] sm:$0xff]
      %v384 = vld [vmem:[#allocation2 + $0x40] sm:$0xff]
      %v385 = vld [vmem:[#allocation2 + $0x48] sm:$0xff]
      %v386 = vld [vmem:[#allocation2 + $0x50] sm:$0xff]
      %v387 = vld [vmem:[#allocation2 + $0x58] sm:$0xff]
      %v388 = vld [vmem:[#allocation2 + $0x60] sm:$0xff]
      %v389 = vld [vmem:[#allocation2 + $0x68] sm:$0xff]
      %v390 = vld [vmem:[#allocation2 + $0x70] sm:$0xff]
      %v391 = vld [vmem:[#allocation2 + $0x78] sm:$0xff]
      %v392 = vpack.c.bf16 %v377, %v376
      %v393 = vpack.c.bf16 %v379, %v378
      %v394 = vpack.c.bf16 %v381, %v380
      %v395 = vpack.c.bf16 %v383, %v382
      %v396 = vpack.c.bf16 %v385, %v384
      %v397 = vpack.c.bf16 %v387, %v386
      %v398 = vpack.c.bf16 %v389, %v388
      %v399 = vpack.c.bf16 %v391, %v390
      %v400 = vld [vmem:[#allocation8] sm:$0xf]
      %v401 = vld [vmem:[#allocation8 + $0x4] sm:$0xf]
      %v402 = vld [vmem:[#allocation8 + $0x8] sm:$0xf]
      %v403 = vld [vmem:[#allocation8 + $0xc] sm:$0xf]
      %v404 = vld [vmem:[#allocation8 + $0x10] sm:$0xf]
      %v405 = vld [vmem:[#allocation8 + $0x14] sm:$0xf]
      %v406 = vld [vmem:[#allocation8 + $0x18] sm:$0xf]
      %v407 = vld [vmem:[#allocation8 + $0x1c] sm:$0xf]
      %v408 = vld [vmem:[#allocation8 + $0x20] sm:$0xf]
      %v409 = vld [vmem:[#allocation8 + $0x24] sm:$0xf]
      %v410 = vld [vmem:[#allocation8 + $0x28] sm:$0xf]
      %v411 = vld [vmem:[#allocation8 + $0x2c] sm:$0xf]
      %v412 = vld [vmem:[#allocation8 + $0x30] sm:$0xf]
      %v413 = vld [vmem:[#allocation8 + $0x34] sm:$0xf]
      %v414 = vld [vmem:[#allocation8 + $0x38] sm:$0xf]
      %v415 = vld [vmem:[#allocation8 + $0x3c] sm:$0xf]
      %v432 = vunpack.c.l.b16 %v400
      %v433 = vunpack.c.l.b16 %v401
      %v434 = vunpack.c.l.b16 %v402
      %v435 = vunpack.c.l.b16 %v403
      %v436 = vunpack.c.l.b16 %v404
      %v437 = vunpack.c.l.b16 %v405
      %v438 = vunpack.c.l.b16 %v406
      %v439 = vunpack.c.l.b16 %v407
      %v440 = vunpack.c.l.b16 %v408
      %v441 = vunpack.c.l.b16 %v409
      %v442 = vunpack.c.l.b16 %v410
      %v443 = vunpack.c.l.b16 %v411
      %v444 = vunpack.c.l.b16 %v412
      %v445 = vunpack.c.l.b16 %v413
      %v446 = vunpack.c.l.b16 %v414
      %v447 = vunpack.c.l.b16 %v415
      %v448 = vpack.c.b16 %v433, %v432
      %v449 = vpack.c.b16 %v435, %v434
      %v450 = vpack.c.b16 %v437, %v436
      %v451 = vpack.c.b16 %v439, %v438
      %v452 = vpack.c.b16 %v441, %v440
      %v453 = vpack.c.b16 %v443, %v442
      %v454 = vpack.c.b16 %v445, %v444
      %v455 = vpack.c.b16 %v447, %v446
      %v464 = vld [vmem:[#allocation9] sm:$0xf]
      %v465 = vld [vmem:[#allocation9 + $0x4] sm:$0xf]
      %v466 = vld [vmem:[#allocation9 + $0x8] sm:$0xf]
      %v467 = vld [vmem:[#allocation9 + $0xc] sm:$0xf]
      %v468 = vld [vmem:[#allocation9 + $0x10] sm:$0xf]
      %v469 = vld [vmem:[#allocation9 + $0x14] sm:$0xf]
      %v470 = vld [vmem:[#allocation9 + $0x18] sm:$0xf]
      %v471 = vld [vmem:[#allocation9 + $0x1c] sm:$0xf]
      %v472 = vld [vmem:[#allocation9 + $0x20] sm:$0xf]
      %v473 = vld [vmem:[#allocation9 + $0x24] sm:$0xf]
      %v474 = vld [vmem:[#allocation9 + $0x28] sm:$0xf]
      %v475 = vld [vmem:[#allocation9 + $0x2c] sm:$0xf]
      %v476 = vld [vmem:[#allocation9 + $0x30] sm:$0xf]
      %v477 = vld [vmem:[#allocation9 + $0x34] sm:$0xf]
      %v478 = vld [vmem:[#allocation9 + $0x38] sm:$0xf]
      %v479 = vld [vmem:[#allocation9 + $0x3c] sm:$0xf]
      %v480 = vld [vmem:[#allocation9 + $0x40] sm:$0xf]
      %v481 = vld [vmem:[#allocation9 + $0x44] sm:$0xf]
      %v482 = vld [vmem:[#allocation9 + $0x48] sm:$0xf]
      %v483 = vld [vmem:[#allocation9 + $0x4c] sm:$0xf]
      %v484 = vld [vmem:[#allocation9 + $0x50] sm:$0xf]
      %v485 = vld [vmem:[#allocation9 + $0x54] sm:$0xf]
      %v486 = vld [vmem:[#allocation9 + $0x58] sm:$0xf]
      %v487 = vld [vmem:[#allocation9 + $0x5c] sm:$0xf]
      %v488 = vld [vmem:[#allocation9 + $0x60] sm:$0xf]
      %v489 = vld [vmem:[#allocation9 + $0x64] sm:$0xf]
      %v490 = vld [vmem:[#allocation9 + $0x68] sm:$0xf]
      %v491 = vld [vmem:[#allocation9 + $0x6c] sm:$0xf]
      %v492 = vld [vmem:[#allocation9 + $0x70] sm:$0xf]
      %v493 = vld [vmem:[#allocation9 + $0x74] sm:$0xf]
      %v494 = vld [vmem:[#allocation9 + $0x78] sm:$0xf]
      %v495 = vld [vmem:[#allocation9 + $0x7c] sm:$0xf]
      %v496 = vld [vmem:[%s4] sm:$0x1]
      %v498 = vlaneseq
      %v499 = vshrl.u32 %v498, 7
      %v500 = vsub.s32 0, %v499
      %v501 = vrot.slane %v496, %v500
      %v535 = vunpack.c.l.b16 %v464
      %v536 = vunpack.c.l.b16 %v465
      %v537 = vunpack.c.l.b16 %v466
      %v538 = vunpack.c.l.b16 %v467
      %v539 = vunpack.c.l.b16 %v468
      %v540 = vunpack.c.l.b16 %v469
      %v541 = vunpack.c.l.b16 %v470
      %v542 = vunpack.c.l.b16 %v471
      %v543 = vunpack.c.l.b16 %v472
      %v544 = vunpack.c.l.b16 %v473
      %v545 = vunpack.c.l.b16 %v474
      %v546 = vunpack.c.l.b16 %v475
      %v547 = vunpack.c.l.b16 %v476
      %v548 = vunpack.c.l.b16 %v477
      %v549 = vunpack.c.l.b16 %v478
      %v550 = vunpack.c.l.b16 %v479
      %v551 = vunpack.c.l.b16 %v480
      %v552 = vunpack.c.l.b16 %v481
      %v553 = vunpack.c.l.b16 %v482
      %v554 = vunpack.c.l.b16 %v483
      %v555 = vunpack.c.l.b16 %v484
      %v556 = vunpack.c.l.b16 %v485
      %v557 = vunpack.c.l.b16 %v486
      %v558 = vunpack.c.l.b16 %v487
      %v559 = vunpack.c.l.b16 %v488
      %v560 = vunpack.c.l.b16 %v489
      %v561 = vunpack.c.l.b16 %v490
      %v562 = vunpack.c.l.b16 %v491
      %v563 = vunpack.c.l.b16 %v492
      %v564 = vunpack.c.l.b16 %v493
      %v565 = vunpack.c.l.b16 %v494
      %v566 = vunpack.c.l.b16 %v495
      %v567 = vpack.c.b16 %v536, %v535
      %v568 = vpack.c.b16 %v538, %v537
      %v569 = vpack.c.b16 %v540, %v539
      %v570 = vpack.c.b16 %v542, %v541
      %v571 = vpack.c.b16 %v544, %v543
      %v572 = vpack.c.b16 %v546, %v545
      %v573 = vpack.c.b16 %v548, %v547
      %v574 = vpack.c.b16 %v550, %v549
      %v575 = vpack.c.b16 %v552, %v551
      %v576 = vpack.c.b16 %v554, %v553
      %v577 = vpack.c.b16 %v556, %v555
      %v578 = vpack.c.b16 %v558, %v557
      %v579 = vpack.c.b16 %v560, %v559
      %v580 = vpack.c.b16 %v562, %v561
      %v581 = vpack.c.b16 %v564, %v563
      %v582 = vpack.c.b16 %v566, %v565
      %599 = vmatprep.subr.bf16.mxu0 0
      %600 = vmatpush1.bf16.msra.mxu0 %v567
      %601 = vmatprep.subr.bf16.mxu0 0
      %602 = vmatpush1.bf16.msra.mxu0 %v568
      %603 = vmatprep.subr.bf16.mxu0 0
      %604 = vmatpush1.bf16.msra.mxu0 %v569
      %605 = vmatprep.subr.bf16.mxu0 0
      %606 = vmatpush1.bf16.msra.mxu0 %v570
      %607 = vmatprep.subr.bf16.mxu0 0
      %608 = vmatpush1.bf16.msra.mxu0 %v571
      %609 = vmatprep.subr.bf16.mxu0 0
      %610 = vmatpush1.bf16.msra.mxu0 %v572
      %611 = vmatprep.subr.bf16.mxu0 0
      %612 = vmatpush1.bf16.msra.mxu0 %v573
      %613 = vmatprep.subr.bf16.mxu0 0
      %614 = vmatpush1.bf16.msra.mxu0 %v574
      %615 = vmatprep.subr.bf16.mxu0 0
      %616 = vmatpush1.bf16.msra.mxu0 %v575
      %617 = vmatprep.subr.bf16.mxu0 0
      %618 = vmatpush1.bf16.msra.mxu0 %v576
      %619 = vmatprep.subr.bf16.mxu0 0
      %620 = vmatpush1.bf16.msra.mxu0 %v577
      %621 = vmatprep.subr.bf16.mxu0 0
      %622 = vmatpush1.bf16.msra.mxu0 %v578
      %623 = vmatprep.subr.bf16.mxu0 0
      %624 = vmatpush1.bf16.msra.mxu0 %v579
      %625 = vmatprep.subr.bf16.mxu0 0
      %626 = vmatpush1.bf16.msra.mxu0 %v580
      %627 = vmatprep.subr.bf16.mxu0 0
      %628 = vmatpush1.bf16.msra.mxu0 %v581
      %629 = vmatprep.subr.bf16.mxu0 0
      %630 = vmatpush1.bf16.msra.mxu0 %v582
      %631 = vmatprep.mubr.bf16.mxu0 %v448
      %632 = vmatmul.mubr.bf16.gmra.mrb[0].mxu0 %v392
      %v633 = vpop.f32.mrb[0].mxu0
      %v634 = vadd.f32 %v501, %v633
      %v635 = vpop.f32.mrb[0].mxu0
      %v636 = vpop.f32.mrb[0].mxu0
      %v637 = vadd.f32 %v501, %v636
      %v638 = vpop.f32.mrb[0].mxu0
      %639 = vmatprep.mubr.bf16.mxu0 %v449
      %640 = vmatmul.mubr.bf16.gmra.mrb[0].mxu0 %v393
      %v641 = vpop.f32.mrb[0].mxu0
      %v642 = vadd.f32 %v501, %v641
      %v643 = vpop.f32.mrb[0].mxu0
      %v644 = vpop.f32.mrb[0].mxu0
      %v645 = vadd.f32 %v501, %v644
      %v646 = vpop.f32.mrb[0].mxu0
      %647 = vmatprep.mubr.bf16.mxu0 %v450
      %648 = vmatmul.mubr.bf16.gmra.mrb[0].mxu0 %v394
      %v649 = vpop.f32.mrb[0].mxu0
      %v650 = vadd.f32 %v501, %v649
      %v651 = vpop.f32.mrb[0].mxu0
      %v652 = vpop.f32.mrb[0].mxu0
      %v653 = vadd.f32 %v501, %v652
      %v654 = vpop.f32.mrb[0].mxu0
      %655 = vmatprep.mubr.bf16.mxu0 %v451
      %656 = vmatmul.mubr.bf16.gmra.mrb[0].mxu0 %v395
      %v657 = vpop.f32.mrb[0].mxu0
      %v658 = vadd.f32 %v501, %v657
      %v659 = vpop.f32.mrb[0].mxu0
      %v660 = vpop.f32.mrb[0].mxu0
      %v661 = vadd.f32 %v501, %v660
      %v662 = vpop.f32.mrb[0].mxu0
      %663 = vmatprep.mubr.bf16.mxu0 %v452
      %664 = vmatmul.mubr.bf16.gmra.mrb[0].mxu0 %v396
      %v665 = vpop.f32.mrb[0].mxu0
      %v666 = vadd.f32 %v501, %v665
      %v667 = vpop.f32.mrb[0].mxu0
      %v668 = vpop.f32.mrb[0].mxu0
      %v669 = vadd.f32 %v501, %v668
      %v670 = vpop.f32.mrb[0].mxu0
      %671 = vmatprep.mubr.bf16.mxu0 %v453
      %672 = vmatmul.mubr.bf16.gmra.mrb[0].mxu0 %v397
      %v673 = vpop.f32.mrb[0].mxu0
      %v674 = vadd.f32 %v501, %v673
      %v675 = vpop.f32.mrb[0].mxu0
      %v676 = vpop.f32.mrb[0].mxu0
      %v677 = vadd.f32 %v501, %v676
      %v678 = vpop.f32.mrb[0].mxu0
      %679 = vmatprep.mubr.bf16.mxu0 %v454
      %680 = vmatmul.mubr.bf16.gmra.mrb[0].mxu0 %v398
      %v681 = vpop.f32.mrb[0].mxu0
      %v682 = vadd.f32 %v501, %v681
      %v683 = vpop.f32.mrb[0].mxu0
      %v684 = vpop.f32.mrb[0].mxu0
      %v685 = vadd.f32 %v501, %v684
      %v686 = vpop.f32.mrb[0].mxu0
      %687 = vmatprep.mubr.bf16.mxu0 %v455
      %688 = vmatmul.mubr.bf16.gmra.mrb[0].mxu0 %v399
      %v689 = vpop.f32.mrb[0].mxu0
      %v690 = vadd.f32 %v501, %v689
      %v691 = vpop.f32.mrb[0].mxu0
      %v692 = vpop.f32.mrb[0].mxu0
      %v693 = vadd.f32 %v501, %v692
      %v694 = vpop.f32.mrb[0].mxu0
      %695 = vdwg.mxu0
      %vm696 = vcmp.gt.f32.partialorder %v634, 0.0
      %vm697 = vcmp.gt.f32.partialorder %v637, 0.0
      %vm698 = vcmp.gt.f32.partialorder %v642, 0.0
      %vm699 = vcmp.gt.f32.partialorder %v645, 0.0
      %vm700 = vcmp.gt.f32.partialorder %v650, 0.0
      %vm701 = vcmp.gt.f32.partialorder %v653, 0.0
      %vm702 = vcmp.gt.f32.partialorder %v658, 0.0
      %vm703 = vcmp.gt.f32.partialorder %v661, 0.0
      %vm704 = vcmp.gt.f32.partialorder %v666, 0.0
      %vm705 = vcmp.gt.f32.partialorder %v669, 0.0
      %vm706 = vcmp.gt.f32.partialorder %v674, 0.0
      %vm707 = vcmp.gt.f32.partialorder %v677, 0.0
      %vm708 = vcmp.gt.f32.partialorder %v682, 0.0
      %vm709 = vcmp.gt.f32.partialorder %v685, 0.0
      %vm710 = vcmp.gt.f32.partialorder %v690, 0.0
      %vm711 = vcmp.gt.f32.partialorder %v693, 0.0
      %v712 = vld [vmem:[%s5] sm:$0x1]
      %v714 = vlaneseq
      %v715 = vshrl.u32 %v714, 7
      %v716 = vsub.s32 0, %v715
      %v717 = vrot.slane %v712, %v716
      %v719 = vmul.f32 %v717, %v634
      %v720 = vmul.f32 %v717, %v637
      %v721 = vmul.f32 %v717, %v642
      %v722 = vmul.f32 %v717, %v645
      %v723 = vmul.f32 %v717, %v650
      %v724 = vmul.f32 %v717, %v653
      %v725 = vmul.f32 %v717, %v658
      %v726 = vmul.f32 %v717, %v661
      %v727 = vmul.f32 %v717, %v666
      %v728 = vmul.f32 %v717, %v669
      %v729 = vmul.f32 %v717, %v674
      %v730 = vmul.f32 %v717, %v677
      %v731 = vmul.f32 %v717, %v682
      %v732 = vmul.f32 %v717, %v685
      %v733 = vmul.f32 %v717, %v690
      %v734 = vmul.f32 %v717, %v693
      %v735 = vsel %vm696, %v634, %v719
      %v736 = vsel %vm697, %v637, %v720
      %v737 = vsel %vm698, %v642, %v721
      %v738 = vsel %vm699, %v645, %v722
      %v739 = vsel %vm700, %v650, %v723
      %v740 = vsel %vm701, %v653, %v724
      %v741 = vsel %vm702, %v658, %v725
      %v742 = vsel %vm703, %v661, %v726
      %v743 = vsel %vm704, %v666, %v727
      %v744 = vsel %vm705, %v669, %v728
      %v745 = vsel %vm706, %v674, %v729
      %v746 = vsel %vm707, %v677, %v730
      %v747 = vsel %vm708, %v682, %v731
      %v748 = vsel %vm709, %v685, %v732
      %v749 = vsel %vm710, %v690, %v733
      %v750 = vsel %vm711, %v693, %v734
      %v751 = vpack.c.bf16 %v736, %v735
      %v752 = vpack.c.bf16 %v738, %v737
      %v753 = vpack.c.bf16 %v740, %v739
      %v754 = vpack.c.bf16 %v742, %v741
      %v755 = vpack.c.bf16 %v744, %v743
      %v756 = vpack.c.bf16 %v746, %v745
      %v757 = vpack.c.bf16 %v748, %v747
      %v758 = vpack.c.bf16 %v750, %v749
      %v767 = vunpack.c.l.b16 %v751
      %v768 = vunpack.c.h.b16 %v751
      %v769 = vunpack.c.l.b16 %v752
      %v770 = vunpack.c.h.b16 %v752
      %v771 = vunpack.c.l.b16 %v753
      %v772 = vunpack.c.h.b16 %v753
      %v773 = vunpack.c.l.b16 %v754
      %v774 = vunpack.c.h.b16 %v754
      %v775 = vunpack.c.l.b16 %v755
      %v776 = vunpack.c.h.b16 %v755
      %v777 = vunpack.c.l.b16 %v756
      %v778 = vunpack.c.h.b16 %v756
      %v779 = vunpack.c.l.b16 %v757
      %v780 = vunpack.c.h.b16 %v757
      %v781 = vunpack.c.l.b16 %v758
      %v782 = vunpack.c.h.b16 %v758
      %v783 = vpack.c.b16 %v767, %v767
      %v784 = vpack.c.b16 %v768, %v768
      %v785 = vpack.c.b16 %v769, %v769
      %v786 = vpack.c.b16 %v770, %v770
      %v787 = vpack.c.b16 %v771, %v771
      %v788 = vpack.c.b16 %v772, %v772
      %v789 = vpack.c.b16 %v773, %v773
      %v790 = vpack.c.b16 %v774, %v774
      %v791 = vpack.c.b16 %v775, %v775
      %v792 = vpack.c.b16 %v776, %v776
      %v793 = vpack.c.b16 %v777, %v777
      %v794 = vpack.c.b16 %v778, %v778
      %v795 = vpack.c.b16 %v779, %v779
      %v796 = vpack.c.b16 %v780, %v780
      %v797 = vpack.c.b16 %v781, %v781
      %v798 = vpack.c.b16 %v782, %v782
      %815 = vst [vmem:[#allocation11] sm:$0xf] %v783
      %816 = vst [vmem:[#allocation11 + $0x4] sm:$0xf] %v784
      %817 = vst [vmem:[#allocation11 + $0x8] sm:$0xf] %v785
      %818 = vst [vmem:[#allocation11 + $0xc] sm:$0xf] %v786
      %819 = vst [vmem:[#allocation11 + $0x10] sm:$0xf] %v787
      %820 = vst [vmem:[#allocation11 + $0x14] sm:$0xf] %v788
      %821 = vst [vmem:[#allocation11 + $0x18] sm:$0xf] %v789
      %822 = vst [vmem:[#allocation11 + $0x1c] sm:$0xf] %v790
      %823 = vst [vmem:[#allocation11 + $0x20] sm:$0xf] %v791
      %824 = vst [vmem:[#allocation11 + $0x24] sm:$0xf] %v792
      %825 = vst [vmem:[#allocation11 + $0x28] sm:$0xf] %v793
      %826 = vst [vmem:[#allocation11 + $0x2c] sm:$0xf] %v794
      %827 = vst [vmem:[#allocation11 + $0x30] sm:$0xf] %v795
      %828 = vst [vmem:[#allocation11 + $0x34] sm:$0xf] %v796
      %829 = vst [vmem:[#allocation11 + $0x38] sm:$0xf] %v797
      %830 = vst [vmem:[#allocation11 + $0x3c] sm:$0xf] %v798
    $region49: #{tpu_custom_call.1} parent=1 // pred_fallthru
      _
    // Predicated region
    $region50: #{tpu_custom_call.1} parent=1 // pred_check
      _
    $region51: #{tpu_custom_call.1} parent=1 // pred_check_branch
      %832 = sbr.rel (0) target = $region53
    $region52: #{tpu_custom_call.1} parent=1 // pred_region
      %s834 = ssub.s32 1024, 1024
      %835 = vsyncadd [#allocation5], %s834
      %s836 = sshll.u32 [#allocation11], 4
      %s837 = int_to_ptr.vmem [resolvable:$true] %s836
      %842 = dma.vmem_to_hbm [thread:$0]  %s837, 1024, %s6, [#allocation5], 64, 64, 4
    $region53: #{tpu_custom_call.1} parent=1 // pred_fallthru
      _
    // Predicated region
    $region54: #{tpu_custom_call.1} parent=1 // pred_check
      _
    $region55: #{tpu_custom_call.1} parent=1 // pred_check_branch
      %844 = sbr.rel (0) target = $region57
    $region56: #{tpu_custom_call.1} parent=1 // pred_region
      %845 = dma.done [#allocation5], 1024
    $region57: #{tpu_custom_call.1} parent=1 // pred_fallthru
      _
    %846 = vsyncpa [#allocation4], 1
    %847 = vsyncpa [#allocation7], 1
    %848 = vsyncpa [#allocation10], 1
    %849 = vsyncpa [#allocation5], 1

</llo_original>
